<compile_context>
chip_gen: v7x
topology: tpu7x:2x2x1
jax: 0.10.0
libtpu: 0.0.40
codegen_flags: <defaults>
</compile_context>

<pallas_src>
import functools

import jax
import jax.numpy as jnp
from jax.experimental import pallas as pl
from jax.experimental.pallas import tpu as pltpu

BN_EPS = 1e-5
MATMUL_DTYPE = jnp.bfloat16   # MXU operand dtype (f32 accumulation everywhere)
_OUT_LANES = 128              # lane-dense kernel output width (FC padded)


def _lstm_kernel(x_ref, s_ref, sh_ref, w_ih_ref, w_hh_ref, wsum_ref, b_ref,
                 w_fc_ref, b_fc_ref, out_ref, *, T, B, H):
    # ---- Input projection for all T timesteps in one MXU call --------------
    # BatchNorm (training-mode stats, folded in the wrapper to per-t scalars
    # s_t, sh_t) is applied algebraically:
    #   gate_x[t] = s_t * (x[t] @ W_ih) + sh_t * colsum(W_ih) + (b_ih + b_hh)
    # gx stays a vreg-resident value (T*B, 4H): no VMEM scratch round trip.
    p = jnp.dot(x_ref[...], w_ih_ref[...], preferred_element_type=jnp.float32)
    gx = s_ref[...] * p + (sh_ref[...] * wsum_ref[...] + b_ref[...])

    # ---- LSTM recurrence ----------------------------------------------------
    # Gate columns were permuted in the wrapper to (i, f, o, g): one sigmoid
    # over the first 3H lanes, tanh only over the last H lanes.
    w_hh = w_hh_ref[...]
    h = jnp.zeros((B, H), jnp.float32)
    c = jnp.zeros((B, H), jnp.float32)
    for t in range(T):                                   # T static: fully unrolled
        gates = gx[t * B:(t + 1) * B, :] + jnp.dot(
            h.astype(w_hh.dtype), w_hh, preferred_element_type=jnp.float32)
        sig = jax.nn.sigmoid(gates[:, :3 * H])
        g_g = jnp.tanh(gates[:, 3 * H:])
        i_g = sig[:, 0 * H:1 * H]
        f_g = sig[:, 1 * H:2 * H]
        o_g = sig[:, 2 * H:3 * H]
        c = f_g * c + i_g * g_g
        h = o_g * jnp.tanh(c)

    # ---- Final Linear on the last hidden state (lane-dense, O padded to 128)
    out_ref[...] = (jnp.dot(h.astype(w_fc_ref.dtype), w_fc_ref[...],
                            preferred_element_type=jnp.float32)
                    + b_fc_ref[...])


def _permute_gates(a):
    """Reorder the last (4H) axis from PyTorch (i, f, g, o) to (i, f, o, g)."""
    i, f, g, o = jnp.split(a, 4, axis=-1)
    return jnp.concatenate([i, f, o, g], axis=-1)


@jax.jit
def lstm_forward(x_btd, gamma, beta, w_ih, w_hh, b_ih, b_hh, w_fc, b_fc):
    """Forward pass of the module.  x_btd: (B, T, D) float32, batch_first."""
    B, T, D = x_btd.shape
    H4 = w_ih.shape[0]
    H = H4 // 4
    O = w_fc.shape[0]

    x = x_btd.astype(jnp.float32)

    # BatchNorm1d(seq_len) training-mode batch statistics: per-t mean/var over
    # (batch, feature) -> T scalar (scale, shift) pairs, hoisted out of the
    # kernel (T scalars, not pre-scaled activations).
    mean = jnp.mean(x, axis=(0, 2))                                  # (T,)
    var = jnp.mean((x - mean[None, :, None]) ** 2, axis=(0, 2))      # biased
    s_t = gamma.astype(jnp.float32) * jax.lax.rsqrt(var + BN_EPS)
    sh_t = beta.astype(jnp.float32) - mean * s_t
    s_rows = jnp.repeat(s_t, B).reshape(T * B, 1)                    # time-major rows
    sh_rows = jnp.repeat(sh_t, B).reshape(T * B, 1)

    # Time-major flatten so the whole input projection is one matmul.
    x_flat = jnp.transpose(x, (1, 0, 2)).reshape(T * B, D).astype(MATMUL_DTYPE)

    w_ih_t = jnp.transpose(w_ih).astype(jnp.float32)                 # (D, 4H)
    w_hh_t = jnp.transpose(w_hh).astype(jnp.float32)                 # (H, 4H)
    wsum = jnp.sum(w_ih_t, axis=0, keepdims=True)                    # (1, 4H) exact f32
    b_comb = (b_ih + b_hh).reshape(1, H4).astype(jnp.float32)        # (1, 4H)

    w_ih_p = _permute_gates(w_ih_t).astype(MATMUL_DTYPE)
    w_hh_p = _permute_gates(w_hh_t).astype(MATMUL_DTYPE)
    wsum_p = _permute_gates(wsum)
    b_p = _permute_gates(b_comb)

    # Lane-dense FC: zero-pad (H, O) -> (H, 128) so the kernel output store is
    # one full unmasked (B, 128) vreg; slice back to O outside.
    w_fc_t = jnp.transpose(w_fc).astype(jnp.float32)                 # (H, O)
    w_fc_pad = jnp.zeros((H, _OUT_LANES), jnp.float32).at[:, :O].set(w_fc_t)
    w_fc_pad = w_fc_pad.astype(MATMUL_DTYPE)
    b_fc_pad = jnp.zeros((1, _OUT_LANES), jnp.float32).at[0, :O].set(
        b_fc.astype(jnp.float32))

    vmem = pl.BlockSpec(memory_space=pltpu.MemorySpace.VMEM)
    out_pad = pl.pallas_call(
        functools.partial(_lstm_kernel, T=T, B=B, H=H),
        out_shape=jax.ShapeDtypeStruct((B, _OUT_LANES), jnp.float32),
        in_specs=[vmem] * 9,
        out_specs=vmem,
    )(x_flat, s_rows, sh_rows, w_ih_p, w_hh_p, wsum_p, b_p, w_fc_pad, b_fc_pad)
    return out_pad[:, :O]


def reference_f32(x_btd, gamma, beta, w_ih, w_hh, b_ih, b_hh, w_fc, b_fc):
    """Literal PyTorch semantics (training-mode BN -> LSTM -> FC), all f32."""
    B, T, D = x_btd.shape
    H = w_hh.shape[1]
    mean = jnp.mean(x_btd, axis=(0, 2), keepdims=True)
    var = jnp.mean((x_btd - mean) ** 2, axis=(0, 2), keepdims=True)
    xn = ((x_btd - mean) / jnp.sqrt(var + BN_EPS)
          * gamma.reshape(1, T, 1) + beta.reshape(1, T, 1))
    h = jnp.zeros((B, H), jnp.float32)
    c = jnp.zeros((B, H), jnp.float32)
    for t in range(T):
        gates = xn[:, t, :] @ w_ih.T + h @ w_hh.T + b_ih + b_hh
        i_g = jax.nn.sigmoid(gates[:, 0 * H:1 * H])
        f_g = jax.nn.sigmoid(gates[:, 1 * H:2 * H])
        g_g = jnp.tanh(gates[:, 2 * H:3 * H])
        o_g = jax.nn.sigmoid(gates[:, 3 * H:4 * H])
        c = f_g * c + i_g * g_g
        h = o_g * jnp.tanh(c)
    return h @ w_fc.T + b_fc


def reference_matched(x_btd, gamma, beta, w_ih, w_hh, b_ih, b_hh, w_fc, b_fc):
    """Pure-JAX replica of the kernel's exact math path (BN fold, MATMUL_DTYPE
    matmul operands, f32 accumulation) for the tight-tolerance check."""
    B, T, D = x_btd.shape
    H4 = w_ih.shape[0]
    H = H4 // 4
    x = x_btd.astype(jnp.float32)
    mean = jnp.mean(x, axis=(0, 2))
    var = jnp.mean((x - mean[None, :, None]) ** 2, axis=(0, 2))
    s_t = gamma.astype(jnp.float32) * jax.lax.rsqrt(var + BN_EPS)
    sh_t = beta.astype(jnp.float32) - mean * s_t

    w_ih_t = jnp.transpose(w_ih).astype(jnp.float32)
    wsum = jnp.sum(w_ih_t, axis=0, keepdims=True)
    b_comb = (b_ih + b_hh).reshape(1, H4).astype(jnp.float32)
    x_flat = jnp.transpose(x, (1, 0, 2)).reshape(T * B, D).astype(MATMUL_DTYPE)
    p = jnp.dot(x_flat, w_ih_t.astype(MATMUL_DTYPE),
                preferred_element_type=jnp.float32)
    gx = (jnp.repeat(s_t, B).reshape(T * B, 1) * p
          + jnp.repeat(sh_t, B).reshape(T * B, 1) * wsum + b_comb)

    w_hh_t = jnp.transpose(w_hh).astype(MATMUL_DTYPE)
    h = jnp.zeros((B, H), jnp.float32)
    c = jnp.zeros((B, H), jnp.float32)
    for t in range(T):
        gates = gx[t * B:(t + 1) * B, :] + jnp.dot(
            h.astype(MATMUL_DTYPE), w_hh_t, preferred_element_type=jnp.float32)
        i_g = jax.nn.sigmoid(gates[:, 0 * H:1 * H])
        f_g = jax.nn.sigmoid(gates[:, 1 * H:2 * H])
        g_g = jnp.tanh(gates[:, 2 * H:3 * H])
        o_g = jax.nn.sigmoid(gates[:, 3 * H:4 * H])
        c = f_g * c + i_g * g_g
        h = o_g * jnp.tanh(c)
    return (jnp.dot(h.astype(MATMUL_DTYPE),
                    jnp.transpose(w_fc).astype(MATMUL_DTYPE),
                    preferred_element_type=jnp.float32)
            + b_fc.astype(jnp.float32))


if __name__ == "__main__":
    # Module hyperparameters (layer_num = 1 for this instantiation)
    batch, seq_len, input_dim, hidden_dim, output_dim = 8, 8, 16, 32, 4

    key = jax.random.PRNGKey(0)
    ks = jax.random.split(key, 9)
    s = 1.0 / jnp.sqrt(hidden_dim)   # PyTorch default uniform init scale

    x = jax.random.normal(ks[0], (batch, seq_len, input_dim), jnp.float32)
    gamma = 1.0 + 0.1 * jax.random.normal(ks[7], (seq_len,), jnp.float32)
    beta = 0.1 * jax.random.normal(ks[8], (seq_len,), jnp.float32)
    w_ih = jax.random.uniform(ks[1], (4 * hidden_dim, input_dim), jnp.float32, -s, s)
    w_hh = jax.random.uniform(ks[2], (4 * hidden_dim, hidden_dim), jnp.float32, -s, s)
    b_ih = jax.random.uniform(ks[3], (4 * hidden_dim,), jnp.float32, -s, s)
    b_hh = jax.random.uniform(ks[4], (4 * hidden_dim,), jnp.float32, -s, s)
    w_fc = jax.random.uniform(ks[5], (output_dim, hidden_dim), jnp.float32, -s, s)
    b_fc = jax.random.uniform(ks[6], (output_dim,), jnp.float32, -s, s)

    out = lstm_forward(x, gamma, beta, w_ih, w_hh, b_ih, b_hh, w_fc, b_fc)
    out = jax.block_until_ready(out)
    assert out.shape == (batch, output_dim)

    # Strict check: identical math path (bf16 MXU operands, f32 accumulation).
    ref_m = reference_matched(x, gamma, beta, w_ih, w_hh, b_ih, b_hh, w_fc, b_fc)
    assert jnp.allclose(out, ref_m, rtol=2e-3, atol=2e-3), (out, ref_m)

    # Loose check: literal f32 PyTorch semantics (bounds the bf16 approximation).
    ref_f = reference_f32(x, gamma, beta, w_ih, w_hh, b_ih, b_hh, w_fc, b_fc)
    assert jnp.allclose(out, ref_f, rtol=1e-1, atol=1e-1), (out, ref_f)

    print("KERNEL_OK")
</pallas_src>

<mosaic_0001>
module attributes {stable_mosaic.version = 11 : i64} {
  func.func @_lstm_kernel(%arg0: memref<64x16xbf16, #tpu.memory_space<vmem>>, %arg1: memref<64x1xf32, #tpu.memory_space<vmem>>, %arg2: memref<64x1xf32, #tpu.memory_space<vmem>>, %arg3: memref<16x128xbf16, #tpu.memory_space<vmem>>, %arg4: memref<32x128xbf16, #tpu.memory_space<vmem>>, %arg5: memref<1x128xf32, #tpu.memory_space<vmem>>, %arg6: memref<1x128xf32, #tpu.memory_space<vmem>>, %arg7: memref<32x128xbf16, #tpu.memory_space<vmem>>, %arg8: memref<1x128xf32, #tpu.memory_space<vmem>>, %arg9: memref<8x128xf32, #tpu.memory_space<vmem>>) attributes {dimension_semantics = [], scalar_prefetch = 0 : i64, scratch_operands = 0 : i64, tpu.core_type = #tpu.core_type<tc>} {
    %c0 = arith.constant 0 : index
    %c0_0 = arith.constant 0 : index
    %0 = vector.load %arg0[%c0, %c0_0] : memref<64x16xbf16, #tpu.memory_space<vmem>>, vector<64x16xbf16>
    %c0_1 = arith.constant 0 : index
    %c0_2 = arith.constant 0 : index
    %1 = vector.load %arg3[%c0_1, %c0_2] : memref<16x128xbf16, #tpu.memory_space<vmem>>, vector<16x128xbf16>
    %cst = arith.constant dense<0.000000e+00> : vector<64x128xf32>
    %2 = tpu.matmul %0, %1, %cst {dimension_numbers = #tpu.dot_dimension_numbers<[1], [0], [0], [1], [0, 0, 1, 1], [], []>} : vector<64x16xbf16>, vector<16x128xbf16>, vector<64x128xf32> -> vector<64x128xf32>
    %c0_3 = arith.constant 0 : index
    %c0_4 = arith.constant 0 : index
    %3 = vector.load %arg1[%c0_3, %c0_4] : memref<64x1xf32, #tpu.memory_space<vmem>>, vector<64x1xf32>
    %4 = vector.broadcast %3 : vector<64x1xf32> to vector<64x128xf32>
    %5 = arith.mulf %4, %2 : vector<64x128xf32>
    %c0_5 = arith.constant 0 : index
    %c0_6 = arith.constant 0 : index
    %6 = vector.load %arg2[%c0_5, %c0_6] : memref<64x1xf32, #tpu.memory_space<vmem>>, vector<64x1xf32>
    %c0_7 = arith.constant 0 : index
    %c0_8 = arith.constant 0 : index
    %7 = vector.load %arg5[%c0_7, %c0_8] : memref<1x128xf32, #tpu.memory_space<vmem>>, vector<1x128xf32>
    %8 = vector.broadcast %6 : vector<64x1xf32> to vector<64x128xf32>
    %9 = vector.broadcast %7 : vector<1x128xf32> to vector<64x128xf32>
    %10 = arith.mulf %8, %9 : vector<64x128xf32>
    %c0_9 = arith.constant 0 : index
    %c0_10 = arith.constant 0 : index
    %11 = vector.load %arg6[%c0_9, %c0_10] : memref<1x128xf32, #tpu.memory_space<vmem>>, vector<1x128xf32>
    %12 = vector.broadcast %11 : vector<1x128xf32> to vector<64x128xf32>
    %13 = arith.addf %10, %12 : vector<64x128xf32>
    %14 = arith.addf %5, %13 : vector<64x128xf32>
    %c0_11 = arith.constant 0 : index
    %c0_12 = arith.constant 0 : index
    %15 = vector.load %arg4[%c0_11, %c0_12] : memref<32x128xbf16, #tpu.memory_space<vmem>>, vector<32x128xbf16>
    %cst_13 = arith.constant 0.000000e+00 : f32
    %16 = vector.broadcast %cst_13 : f32 to vector<8x32xf32>
    %cst_14 = arith.constant 0.000000e+00 : f32
    %17 = vector.broadcast %cst_14 : f32 to vector<8x32xf32>
    %18 = vector.extract_strided_slice %14 {offsets = [0, 0], sizes = [8, 128], strides = [1, 1]} : vector<64x128xf32> to vector<8x128xf32>
    %19 = arith.truncf %16 : vector<8x32xf32> to vector<8x32xbf16>
    %cst_15 = arith.constant dense<0.000000e+00> : vector<8x128xf32>
    %20 = tpu.matmul %19, %15, %cst_15 {dimension_numbers = #tpu.dot_dimension_numbers<[1], [0], [0], [1], [0, 0, 1, 1], [], []>} : vector<8x32xbf16>, vector<32x128xbf16>, vector<8x128xf32> -> vector<8x128xf32>
    %21 = arith.addf %18, %20 : vector<8x128xf32>
    %22 = vector.extract_strided_slice %21 {offsets = [0, 0], sizes = [8, 96], strides = [1, 1]} : vector<8x128xf32> to vector<8x96xf32>
    %23 = arith.negf %22 : vector<8x96xf32>
    %24 = math.exp %23 : vector<8x96xf32>
    %cst_16 = arith.constant 1.000000e+00 : f32
    %25 = vector.broadcast %cst_16 : f32 to vector<8x96xf32>
    %26 = arith.addf %25, %24 : vector<8x96xf32>
    %27 = arith.divf %25, %26 : vector<8x96xf32>
    %28 = vector.extract_strided_slice %21 {offsets = [0, 96], sizes = [8, 32], strides = [1, 1]} : vector<8x128xf32> to vector<8x32xf32>
    %29 = math.tanh %28 : vector<8x32xf32>
    %30 = vector.extract_strided_slice %27 {offsets = [0, 0], sizes = [8, 32], strides = [1, 1]} : vector<8x96xf32> to vector<8x32xf32>
    %31 = vector.extract_strided_slice %27 {offsets = [0, 32], sizes = [8, 32], strides = [1, 1]} : vector<8x96xf32> to vector<8x32xf32>
    %32 = vector.extract_strided_slice %27 {offsets = [0, 64], sizes = [8, 32], strides = [1, 1]} : vector<8x96xf32> to vector<8x32xf32>
    %33 = arith.mulf %31, %17 : vector<8x32xf32>
    %34 = arith.mulf %30, %29 : vector<8x32xf32>
    %35 = arith.addf %33, %34 : vector<8x32xf32>
    %36 = math.tanh %35 : vector<8x32xf32>
    %37 = arith.mulf %32, %36 : vector<8x32xf32>
    %38 = vector.extract_strided_slice %14 {offsets = [8, 0], sizes = [8, 128], strides = [1, 1]} : vector<64x128xf32> to vector<8x128xf32>
    %39 = arith.truncf %37 : vector<8x32xf32> to vector<8x32xbf16>
    %cst_17 = arith.constant dense<0.000000e+00> : vector<8x128xf32>
    %40 = tpu.matmul %39, %15, %cst_17 {dimension_numbers = #tpu.dot_dimension_numbers<[1], [0], [0], [1], [0, 0, 1, 1], [], []>} : vector<8x32xbf16>, vector<32x128xbf16>, vector<8x128xf32> -> vector<8x128xf32>
    %41 = arith.addf %38, %40 : vector<8x128xf32>
    %42 = vector.extract_strided_slice %41 {offsets = [0, 0], sizes = [8, 96], strides = [1, 1]} : vector<8x128xf32> to vector<8x96xf32>
    %43 = arith.negf %42 : vector<8x96xf32>
    %44 = math.exp %43 : vector<8x96xf32>
    %cst_18 = arith.constant 1.000000e+00 : f32
    %45 = vector.broadcast %cst_18 : f32 to vector<8x96xf32>
    %46 = arith.addf %45, %44 : vector<8x96xf32>
    %47 = arith.divf %45, %46 : vector<8x96xf32>
    %48 = vector.extract_strided_slice %41 {offsets = [0, 96], sizes = [8, 32], strides = [1, 1]} : vector<8x128xf32> to vector<8x32xf32>
    %49 = math.tanh %48 : vector<8x32xf32>
    %50 = vector.extract_strided_slice %47 {offsets = [0, 0], sizes = [8, 32], strides = [1, 1]} : vector<8x96xf32> to vector<8x32xf32>
    %51 = vector.extract_strided_slice %47 {offsets = [0, 32], sizes = [8, 32], strides = [1, 1]} : vector<8x96xf32> to vector<8x32xf32>
    %52 = vector.extract_strided_slice %47 {offsets = [0, 64], sizes = [8, 32], strides = [1, 1]} : vector<8x96xf32> to vector<8x32xf32>
    %53 = arith.mulf %51, %35 : vector<8x32xf32>
    %54 = arith.mulf %50, %49 : vector<8x32xf32>
    %55 = arith.addf %53, %54 : vector<8x32xf32>
    %56 = math.tanh %55 : vector<8x32xf32>
    %57 = arith.mulf %52, %56 : vector<8x32xf32>
    %58 = vector.extract_strided_slice %14 {offsets = [16, 0], sizes = [8, 128], strides = [1, 1]} : vector<64x128xf32> to vector<8x128xf32>
    %59 = arith.truncf %57 : vector<8x32xf32> to vector<8x32xbf16>
    %cst_19 = arith.constant dense<0.000000e+00> : vector<8x128xf32>
    %60 = tpu.matmul %59, %15, %cst_19 {dimension_numbers = #tpu.dot_dimension_numbers<[1], [0], [0], [1], [0, 0, 1, 1], [], []>} : vector<8x32xbf16>, vector<32x128xbf16>, vector<8x128xf32> -> vector<8x128xf32>
    %61 = arith.addf %58, %60 : vector<8x128xf32>
    %62 = vector.extract_strided_slice %61 {offsets = [0, 0], sizes = [8, 96], strides = [1, 1]} : vector<8x128xf32> to vector<8x96xf32>
    %63 = arith.negf %62 : vector<8x96xf32>
    %64 = math.exp %63 : vector<8x96xf32>
    %cst_20 = arith.constant 1.000000e+00 : f32
    %65 = vector.broadcast %cst_20 : f32 to vector<8x96xf32>
    %66 = arith.addf %65, %64 : vector<8x96xf32>
    %67 = arith.divf %65, %66 : vector<8x96xf32>
    %68 = vector.extract_strided_slice %61 {offsets = [0, 96], sizes = [8, 32], strides = [1, 1]} : vector<8x128xf32> to vector<8x32xf32>
    %69 = math.tanh %68 : vector<8x32xf32>
    %70 = vector.extract_strided_slice %67 {offsets = [0, 0], sizes = [8, 32], strides = [1, 1]} : vector<8x96xf32> to vector<8x32xf32>
    %71 = vector.extract_strided_slice %67 {offsets = [0, 32], sizes = [8, 32], strides = [1, 1]} : vector<8x96xf32> to vector<8x32xf32>
    %72 = vector.extract_strided_slice %67 {offsets = [0, 64], sizes = [8, 32], strides = [1, 1]} : vector<8x96xf32> to vector<8x32xf32>
    %73 = arith.mulf %71, %55 : vector<8x32xf32>
    %74 = arith.mulf %70, %69 : vector<8x32xf32>
    %75 = arith.addf %73, %74 : vector<8x32xf32>
    %76 = math.tanh %75 : vector<8x32xf32>
    %77 = arith.mulf %72, %76 : vector<8x32xf32>
    %78 = vector.extract_strided_slice %14 {offsets = [24, 0], sizes = [8, 128], strides = [1, 1]} : vector<64x128xf32> to vector<8x128xf32>
    %79 = arith.truncf %77 : vector<8x32xf32> to vector<8x32xbf16>
    %cst_21 = arith.constant dense<0.000000e+00> : vector<8x128xf32>
    %80 = tpu.matmul %79, %15, %cst_21 {dimension_numbers = #tpu.dot_dimension_numbers<[1], [0], [0], [1], [0, 0, 1, 1], [], []>} : vector<8x32xbf16>, vector<32x128xbf16>, vector<8x128xf32> -> vector<8x128xf32>
    %81 = arith.addf %78, %80 : vector<8x128xf32>
    %82 = vector.extract_strided_slice %81 {offsets = [0, 0], sizes = [8, 96], strides = [1, 1]} : vector<8x128xf32> to vector<8x96xf32>
    %83 = arith.negf %82 : vector<8x96xf32>
    %84 = math.exp %83 : vector<8x96xf32>
    %cst_22 = arith.constant 1.000000e+00 : f32
    %85 = vector.broadcast %cst_22 : f32 to vector<8x96xf32>
    %86 = arith.addf %85, %84 : vector<8x96xf32>
    %87 = arith.divf %85, %86 : vector<8x96xf32>
    %88 = vector.extract_strided_slice %81 {offsets = [0, 96], sizes = [8, 32], strides = [1, 1]} : vector<8x128xf32> to vector<8x32xf32>
    %89 = math.tanh %88 : vector<8x32xf32>
    %90 = vector.extract_strided_slice %87 {offsets = [0, 0], sizes = [8, 32], strides = [1, 1]} : vector<8x96xf32> to vector<8x32xf32>
    %91 = vector.extract_strided_slice %87 {offsets = [0, 32], sizes = [8, 32], strides = [1, 1]} : vector<8x96xf32> to vector<8x32xf32>
    %92 = vector.extract_strided_slice %87 {offsets = [0, 64], sizes = [8, 32], strides = [1, 1]} : vector<8x96xf32> to vector<8x32xf32>
    %93 = arith.mulf %91, %75 : vector<8x32xf32>
    %94 = arith.mulf %90, %89 : vector<8x32xf32>
    %95 = arith.addf %93, %94 : vector<8x32xf32>
    %96 = math.tanh %95 : vector<8x32xf32>
    %97 = arith.mulf %92, %96 : vector<8x32xf32>
    %98 = vector.extract_strided_slice %14 {offsets = [32, 0], sizes = [8, 128], strides = [1, 1]} : vector<64x128xf32> to vector<8x128xf32>
    %99 = arith.truncf %97 : vector<8x32xf32> to vector<8x32xbf16>
    %cst_23 = arith.constant dense<0.000000e+00> : vector<8x128xf32>
    %100 = tpu.matmul %99, %15, %cst_23 {dimension_numbers = #tpu.dot_dimension_numbers<[1], [0], [0], [1], [0, 0, 1, 1], [], []>} : vector<8x32xbf16>, vector<32x128xbf16>, vector<8x128xf32> -> vector<8x128xf32>
    %101 = arith.addf %98, %100 : vector<8x128xf32>
    %102 = vector.extract_strided_slice %101 {offsets = [0, 0], sizes = [8, 96], strides = [1, 1]} : vector<8x128xf32> to vector<8x96xf32>
    %103 = arith.negf %102 : vector<8x96xf32>
    %104 = math.exp %103 : vector<8x96xf32>
    %cst_24 = arith.constant 1.000000e+00 : f32
    %105 = vector.broadcast %cst_24 : f32 to vector<8x96xf32>
    %106 = arith.addf %105, %104 : vector<8x96xf32>
    %107 = arith.divf %105, %106 : vector<8x96xf32>
    %108 = vector.extract_strided_slice %101 {offsets = [0, 96], sizes = [8, 32], strides = [1, 1]} : vector<8x128xf32> to vector<8x32xf32>
    %109 = math.tanh %108 : vector<8x32xf32>
    %110 = vector.extract_strided_slice %107 {offsets = [0, 0], sizes = [8, 32], strides = [1, 1]} : vector<8x96xf32> to vector<8x32xf32>
    %111 = vector.extract_strided_slice %107 {offsets = [0, 32], sizes = [8, 32], strides = [1, 1]} : vector<8x96xf32> to vector<8x32xf32>
    %112 = vector.extract_strided_slice %107 {offsets = [0, 64], sizes = [8, 32], strides = [1, 1]} : vector<8x96xf32> to vector<8x32xf32>
    %113 = arith.mulf %111, %95 : vector<8x32xf32>
    %114 = arith.mulf %110, %109 : vector<8x32xf32>
    %115 = arith.addf %113, %114 : vector<8x32xf32>
    %116 = math.tanh %115 : vector<8x32xf32>
    %117 = arith.mulf %112, %116 : vector<8x32xf32>
    %118 = vector.extract_strided_slice %14 {offsets = [40, 0], sizes = [8, 128], strides = [1, 1]} : vector<64x128xf32> to vector<8x128xf32>
    %119 = arith.truncf %117 : vector<8x32xf32> to vector<8x32xbf16>
    %cst_25 = arith.constant dense<0.000000e+00> : vector<8x128xf32>
    %120 = tpu.matmul %119, %15, %cst_25 {dimension_numbers = #tpu.dot_dimension_numbers<[1], [0], [0], [1], [0, 0, 1, 1], [], []>} : vector<8x32xbf16>, vector<32x128xbf16>, vector<8x128xf32> -> vector<8x128xf32>
    %121 = arith.addf %118, %120 : vector<8x128xf32>
    %122 = vector.extract_strided_slice %121 {offsets = [0, 0], sizes = [8, 96], strides = [1, 1]} : vector<8x128xf32> to vector<8x96xf32>
    %123 = arith.negf %122 : vector<8x96xf32>
    %124 = math.exp %123 : vector<8x96xf32>
    %cst_26 = arith.constant 1.000000e+00 : f32
    %125 = vector.broadcast %cst_26 : f32 to vector<8x96xf32>
    %126 = arith.addf %125, %124 : vector<8x96xf32>
    %127 = arith.divf %125, %126 : vector<8x96xf32>
    %128 = vector.extract_strided_slice %121 {offsets = [0, 96], sizes = [8, 32], strides = [1, 1]} : vector<8x128xf32> to vector<8x32xf32>
    %129 = math.tanh %128 : vector<8x32xf32>
    %130 = vector.extract_strided_slice %127 {offsets = [0, 0], sizes = [8, 32], strides = [1, 1]} : vector<8x96xf32> to vector<8x32xf32>
    %131 = vector.extract_strided_slice %127 {offsets = [0, 32], sizes = [8, 32], strides = [1, 1]} : vector<8x96xf32> to vector<8x32xf32>
    %132 = vector.extract_strided_slice %127 {offsets = [0, 64], sizes = [8, 32], strides = [1, 1]} : vector<8x96xf32> to vector<8x32xf32>
    %133 = arith.mulf %131, %115 : vector<8x32xf32>
    %134 = arith.mulf %130, %129 : vector<8x32xf32>
    %135 = arith.addf %133, %134 : vector<8x32xf32>
    %136 = math.tanh %135 : vector<8x32xf32>
    %137 = arith.mulf %132, %136 : vector<8x32xf32>
    %138 = vector.extract_strided_slice %14 {offsets = [48, 0], sizes = [8, 128], strides = [1, 1]} : vector<64x128xf32> to vector<8x128xf32>
    %139 = arith.truncf %137 : vector<8x32xf32> to vector<8x32xbf16>
    %cst_27 = arith.constant dense<0.000000e+00> : vector<8x128xf32>
    %140 = tpu.matmul %139, %15, %cst_27 {dimension_numbers = #tpu.dot_dimension_numbers<[1], [0], [0], [1], [0, 0, 1, 1], [], []>} : vector<8x32xbf16>, vector<32x128xbf16>, vector<8x128xf32> -> vector<8x128xf32>
    %141 = arith.addf %138, %140 : vector<8x128xf32>
    %142 = vector.extract_strided_slice %141 {offsets = [0, 0], sizes = [8, 96], strides = [1, 1]} : vector<8x128xf32> to vector<8x96xf32>
    %143 = arith.negf %142 : vector<8x96xf32>
    %144 = math.exp %143 : vector<8x96xf32>
    %cst_28 = arith.constant 1.000000e+00 : f32
    %145 = vector.broadcast %cst_28 : f32 to vector<8x96xf32>
    %146 = arith.addf %145, %144 : vector<8x96xf32>
    %147 = arith.divf %145, %146 : vector<8x96xf32>
    %148 = vector.extract_strided_slice %141 {offsets = [0, 96], sizes = [8, 32], strides = [1, 1]} : vector<8x128xf32> to vector<8x32xf32>
    %149 = math.tanh %148 : vector<8x32xf32>
    %150 = vector.extract_strided_slice %147 {offsets = [0, 0], sizes = [8, 32], strides = [1, 1]} : vector<8x96xf32> to vector<8x32xf32>
    %151 = vector.extract_strided_slice %147 {offsets = [0, 32], sizes = [8, 32], strides = [1, 1]} : vector<8x96xf32> to vector<8x32xf32>
    %152 = vector.extract_strided_slice %147 {offsets = [0, 64], sizes = [8, 32], strides = [1, 1]} : vector<8x96xf32> to vector<8x32xf32>
    %153 = arith.mulf %151, %135 : vector<8x32xf32>
    %154 = arith.mulf %150, %149 : vector<8x32xf32>
    %155 = arith.addf %153, %154 : vector<8x32xf32>
    %156 = math.tanh %155 : vector<8x32xf32>
    %157 = arith.mulf %152, %156 : vector<8x32xf32>
    %158 = vector.extract_strided_slice %14 {offsets = [56, 0], sizes = [8, 128], strides = [1, 1]} : vector<64x128xf32> to vector<8x128xf32>
    %159 = arith.truncf %157 : vector<8x32xf32> to vector<8x32xbf16>
    %cst_29 = arith.constant dense<0.000000e+00> : vector<8x128xf32>
    %160 = tpu.matmul %159, %15, %cst_29 {dimension_numbers = #tpu.dot_dimension_numbers<[1], [0], [0], [1], [0, 0, 1, 1], [], []>} : vector<8x32xbf16>, vector<32x128xbf16>, vector<8x128xf32> -> vector<8x128xf32>
    %161 = arith.addf %158, %160 : vector<8x128xf32>
    %162 = vector.extract_strided_slice %161 {offsets = [0, 0], sizes = [8, 96], strides = [1, 1]} : vector<8x128xf32> to vector<8x96xf32>
    %163 = arith.negf %162 : vector<8x96xf32>
    %164 = math.exp %163 : vector<8x96xf32>
    %cst_30 = arith.constant 1.000000e+00 : f32
    %165 = vector.broadcast %cst_30 : f32 to vector<8x96xf32>
    %166 = arith.addf %165, %164 : vector<8x96xf32>
    %167 = arith.divf %165, %166 : vector<8x96xf32>
    %168 = vector.extract_strided_slice %161 {offsets = [0, 96], sizes = [8, 32], strides = [1, 1]} : vector<8x128xf32> to vector<8x32xf32>
    %169 = math.tanh %168 : vector<8x32xf32>
    %170 = vector.extract_strided_slice %167 {offsets = [0, 0], sizes = [8, 32], strides = [1, 1]} : vector<8x96xf32> to vector<8x32xf32>
    %171 = vector.extract_strided_slice %167 {offsets = [0, 32], sizes = [8, 32], strides = [1, 1]} : vector<8x96xf32> to vector<8x32xf32>
    %172 = vector.extract_strided_slice %167 {offsets = [0, 64], sizes = [8, 32], strides = [1, 1]} : vector<8x96xf32> to vector<8x32xf32>
    %173 = arith.mulf %171, %155 : vector<8x32xf32>
    %174 = arith.mulf %170, %169 : vector<8x32xf32>
    %175 = arith.addf %173, %174 : vector<8x32xf32>
    %176 = math.tanh %175 : vector<8x32xf32>
    %177 = arith.mulf %172, %176 : vector<8x32xf32>
    %178 = arith.truncf %177 : vector<8x32xf32> to vector<8x32xbf16>
    %c0_31 = arith.constant 0 : index
    %c0_32 = arith.constant 0 : index
    %179 = vector.load %arg7[%c0_31, %c0_32] : memref<32x128xbf16, #tpu.memory_space<vmem>>, vector<32x128xbf16>
    %cst_33 = arith.constant dense<0.000000e+00> : vector<8x128xf32>
    %180 = tpu.matmul %178, %179, %cst_33 {dimension_numbers = #tpu.dot_dimension_numbers<[1], [0], [0], [1], [0, 0, 1, 1], [], []>} : vector<8x32xbf16>, vector<32x128xbf16>, vector<8x128xf32> -> vector<8x128xf32>
    %c0_34 = arith.constant 0 : index
    %c0_35 = arith.constant 0 : index
    %181 = vector.load %arg8[%c0_34, %c0_35] : memref<1x128xf32, #tpu.memory_space<vmem>>, vector<1x128xf32>
    %182 = vector.broadcast %181 : vector<1x128xf32> to vector<8x128xf32>
    %183 = arith.addf %180, %182 : vector<8x128xf32>
    %c0_36 = arith.constant 0 : index
    %c0_37 = arith.constant 0 : index
    %184 = vector.load %arg9[%c0_36, %c0_37] : memref<8x128xf32, #tpu.memory_space<vmem>>, vector<8x128xf32>
    tpu.vector_store %arg9[%c0_36, %c0_37], %183 {strides = array<i32>} : memref<8x128xf32, #tpu.memory_space<vmem>>, vector<8x128xf32>,
    return
  }
}

</mosaic_0001>

<llo_original>
// kernel: lstm_forward.1
$region0: #{lstm_forward.1}
  #allocation0 [shape = 'u32[]', space=smem, size = 0x4, offset = 0x4, fixed_abs, tag = 'smem constant byte address 0x4 - core index']
  #allocation1 [shape = 'u32[144,128]{1,0:T(1,128)}', space=vmem, size = 0x12000, scoped, tag = 'internal scratch']
  %s0 = inlined_call_operand.vmem [shape: bf16[64,16], index: 0, kind: input, shape index: {}]
  %s1 = inlined_call_operand.vmem [shape: f32[64,1], index: 1, kind: input, shape index: {}]
  %s2 = inlined_call_operand.vmem [shape: f32[64,1], index: 2, kind: input, shape index: {}]
  %s3 = inlined_call_operand.vmem [shape: bf16[16,128], index: 3, kind: input, shape index: {}]
  %s4 = inlined_call_operand.vmem [shape: bf16[32,128], index: 4, kind: input, shape index: {}]
  %s5 = inlined_call_operand.vmem [shape: f32[1,128], index: 5, kind: input, shape index: {}]
  %s6 = inlined_call_operand.vmem [shape: f32[1,128], index: 6, kind: input, shape index: {}]
  %s7 = inlined_call_operand.vmem [shape: bf16[32,128], index: 7, kind: input, shape index: {}]
  %s8 = inlined_call_operand.vmem [shape: f32[1,128], index: 8, kind: input, shape index: {}]
  %s9 = inlined_call_operand.vmem [shape: f32[8,128], index: 9, kind: output, shape index: {}]
  %s10 = sld [smem:[#allocation0]]
  $region46: #{lstm_forward.1} parent=0
    _
  %s12 = ssub.s32 1, %s10
  %s13 = scalar_select 0, %s12, %s10
  // Predicated region
  $region2: #{lstm_forward.1} parent=0 // pred_check
    _
  $region3: #{lstm_forward.1} parent=0 // pred_check_branch
    %15 = sbr.rel (0) target = $region5
  $region4: #{lstm_forward.1} parent=0 // pred_region
    _
  $region5: #{lstm_forward.1} parent=0 // pred_fallthru
    _
  // Predicated region
  $region6: #{lstm_forward.1} parent=0 // pred_check
    _
  $region7: #{lstm_forward.1} parent=0 // pred_check_branch
    %17 = sbr.rel (0) target = $region9
  $region8: #{lstm_forward.1} parent=0 // pred_region
    _
  $region9: #{lstm_forward.1} parent=0 // pred_fallthru
    _
  // Predicated region
  $region10: #{lstm_forward.1} parent=0 // pred_check
    _
  $region11: #{lstm_forward.1} parent=0 // pred_check_branch
    %19 = sbr.rel (0) target = $region13
  $region12: #{lstm_forward.1} parent=0 // pred_region
    _
  $region13: #{lstm_forward.1} parent=0 // pred_fallthru
    _
  // Predicated region
  $region14: #{lstm_forward.1} parent=0 // pred_check
    _
  $region15: #{lstm_forward.1} parent=0 // pred_check_branch
    %21 = sbr.rel (0) target = $region17
  $region16: #{lstm_forward.1} parent=0 // pred_region
    _
  $region17: #{lstm_forward.1} parent=0 // pred_fallthru
    _
  // Predicated region
  $region18: #{lstm_forward.1} parent=0 // pred_check
    _
  $region19: #{lstm_forward.1} parent=0 // pred_check_branch
    %23 = sbr.rel (0) target = $region21
  $region20: #{lstm_forward.1} parent=0 // pred_region
    _
  $region21: #{lstm_forward.1} parent=0 // pred_fallthru
    _
  // Predicated region
  $region22: #{lstm_forward.1} parent=0 // pred_check
    _
  $region23: #{lstm_forward.1} parent=0 // pred_check_branch
    %25 = sbr.rel (0) target = $region25
  $region24: #{lstm_forward.1} parent=0 // pred_region
    _
  $region25: #{lstm_forward.1} parent=0 // pred_fallthru
    _
  // Predicated region
  $region26: #{lstm_forward.1} parent=0 // pred_check
    _
  $region27: #{lstm_forward.1} parent=0 // pred_check_branch
    %27 = sbr.rel (0) target = $region29
  $region28: #{lstm_forward.1} parent=0 // pred_region
    _
  $region29: #{lstm_forward.1} parent=0 // pred_fallthru
    _
  // Predicated region
  $region30: #{lstm_forward.1} parent=0 // pred_check
    _
  $region31: #{lstm_forward.1} parent=0 // pred_check_branch
    %29 = sbr.rel (0) target = $region33
  $region32: #{lstm_forward.1} parent=0 // pred_region
    _
  $region33: #{lstm_forward.1} parent=0 // pred_fallthru
    _
  // Predicated region
  $region34: #{lstm_forward.1} parent=0 // pred_check
    _
  $region35: #{lstm_forward.1} parent=0 // pred_check_branch
    %31 = sbr.rel (0) target = $region37
  $region36: #{lstm_forward.1} parent=0 // pred_region
    _
  $region37: #{lstm_forward.1} parent=0 // pred_fallthru
    _
  %v33 = vld [vmem:[%s0] sm:$0xf]
  %v34 = vld [vmem:[%s0 + $0x4] sm:$0xf]
  %v35 = vld [vmem:[%s0 + $0x8] sm:$0xf]
  %v36 = vld [vmem:[%s0 + $0xc] sm:$0xf]
  %v37 = vld [vmem:[%s0 + $0x10] sm:$0xf]
  %v38 = vld [vmem:[%s0 + $0x14] sm:$0xf]
  %v39 = vld [vmem:[%s0 + $0x18] sm:$0xf]
  %v40 = vld [vmem:[%s0 + $0x1c] sm:$0xf]
  %v41 = vld [vmem:[%s3] sm:$0xf]
  %v42 = vld [vmem:[%s3 + $0x4] sm:$0xf]
  %v51 = vunpack.c.l.b16 %v33
  %v52 = vunpack.c.l.b16 %v34
  %v53 = vunpack.c.l.b16 %v35
  %v54 = vunpack.c.l.b16 %v36
  %v55 = vunpack.c.l.b16 %v37
  %v56 = vunpack.c.l.b16 %v38
  %v57 = vunpack.c.l.b16 %v39
  %v58 = vunpack.c.l.b16 %v40
  %v59 = vpack.c.b16 %v52, %v51
  %v60 = vpack.c.b16 %v54, %v53
  %v61 = vpack.c.b16 %v56, %v55
  %v62 = vpack.c.b16 %v58, %v57
  %v65 = vunpack.c.l.b16 %v41
  %v66 = vunpack.c.l.b16 %v42
  %v67 = vpack.c.b16 %v66, %v65
  %vm69 = vcmask 130048
  %v71 = vsel %vm69, %v59, 0
  %v74 = vsel %vm69, %v60, 0
  %v77 = vsel %vm69, %v61, 0
  %v80 = vsel %vm69, %v62, 0
  %82 = vmatprep.subr.bf16.mxu0 0
  %83 = vmatpush1.bf16.msra.mxu0 %v67
  %84 = vmatprep.subr.bf16.mxu0 0
  %85 = vmatpush1.bf16.msra.mxu0 0
  %86 = vmatprep.subr.bf16.mxu0 0
  %87 = vmatpush1.bf16.msra.mxu0 0
  %88 = vmatprep.subr.bf16.mxu0 0
  %89 = vmatpush1.bf16.msra.mxu0 0
  %90 = vmatprep.subr.bf16.mxu0 0
  %91 = vmatpush1.bf16.msra.mxu0 0
  %92 = vmatprep.subr.bf16.mxu0 0
  %93 = vmatpush1.bf16.msra.mxu0 0
  %94 = vmatprep.subr.bf16.mxu0 0
  %95 = vmatpush1.bf16.msra.mxu0 0
  %96 = vmatprep.subr.bf16.mxu0 0
  %97 = vmatpush1.bf16.msra.mxu0 0
  %98 = vmatprep.subr.bf16.mxu0 0
  %99 = vmatpush1.bf16.msra.mxu0 0
  %100 = vmatprep.subr.bf16.mxu0 0
  %101 = vmatpush1.bf16.msra.mxu0 0
  %102 = vmatprep.subr.bf16.mxu0 0
  %103 = vmatpush1.bf16.msra.mxu0 0
  %104 = vmatprep.subr.bf16.mxu0 0
  %105 = vmatpush1.bf16.msra.mxu0 0
  %106 = vmatprep.subr.bf16.mxu0 0
  %107 = vmatpush1.bf16.msra.mxu0 0
  %108 = vmatprep.subr.bf16.mxu0 0
  %109 = vmatpush1.bf16.msra.mxu0 0
  %110 = vmatprep.subr.bf16.mxu0 0
  %111 = vmatpush1.bf16.msra.mxu0 0
  %112 = vmatprep.subr.bf16.mxu0 0
  %113 = vmatpush1.bf16.msra.mxu0 0
  %114 = vmatprep.mubr.bf16.mxu0 0
  %115 = vmatmul.mubr.bf16.gmra.mrb[0].mxu0 %v71
  %v116 = vpop.f32.mrb[0].mxu0
  %v117 = vadd.f32 0.0, %v116
  %v118 = vpop.f32.mrb[0].mxu0
  %v119 = vpop.f32.mrb[0].mxu0
  %v120 = vadd.f32 0.0, %v119
  %v121 = vpop.f32.mrb[0].mxu0
  %122 = vmatprep.mubr.bf16.mxu0 0
  %123 = vmatmul.mubr.bf16.gmra.mrb[0].mxu0 %v74
  %v124 = vpop.f32.mrb[0].mxu0
  %v125 = vadd.f32 0.0, %v124
  %v126 = vpop.f32.mrb[0].mxu0
  %v127 = vpop.f32.mrb[0].mxu0
  %v128 = vadd.f32 0.0, %v127
  %v129 = vpop.f32.mrb[0].mxu0
  %130 = vmatprep.mubr.bf16.mxu0 0
  %131 = vmatmul.mubr.bf16.gmra.mrb[0].mxu0 %v77
  %v132 = vpop.f32.mrb[0].mxu0
  %v133 = vadd.f32 0.0, %v132
  %v134 = vpop.f32.mrb[0].mxu0
  %v135 = vpop.f32.mrb[0].mxu0
  %v136 = vadd.f32 0.0, %v135
  %v137 = vpop.f32.mrb[0].mxu0
  %138 = vmatprep.mubr.bf16.mxu0 0
  %139 = vmatmul.mubr.bf16.gmra.mrb[0].mxu0 %v80
  %v140 = vpop.f32.mrb[0].mxu0
  %v141 = vadd.f32 0.0, %v140
  %v142 = vpop.f32.mrb[0].mxu0
  %v143 = vpop.f32.mrb[0].mxu0
  %v144 = vadd.f32 0.0, %v143
  %v145 = vpop.f32.mrb[0].mxu0
  %146 = vdwg.mxu0
  %v147 = vld [vmem:[%s1] sm:$0xff]
  %v148 = vld [vmem:[%s1 + $0x8] sm:$0xff]
  %v149 = vld [vmem:[%s1 + $0x10] sm:$0xff]
  %v150 = vld [vmem:[%s1 + $0x18] sm:$0xff]
  %v151 = vld [vmem:[%s1 + $0x20] sm:$0xff]
  %v152 = vld [vmem:[%s1 + $0x28] sm:$0xff]
  %v153 = vld [vmem:[%s1 + $0x30] sm:$0xff]
  %v154 = vld [vmem:[%s1 + $0x38] sm:$0xff]
  %156 = vset.pattern.permute.xlu0 0
  %157 = vperm.xlu0 %156, %v147
  %v158 = vpop.permute.xlu0 %157
  %161 = vset.pattern.permute.xlu0 0
  %162 = vperm.xlu0 %161, %v148
  %v163 = vpop.permute.xlu0 %162
  %166 = vset.pattern.permute.xlu0 0
  %167 = vperm.xlu0 %166, %v149
  %v168 = vpop.permute.xlu0 %167
  %171 = vset.pattern.permute.xlu0 0
  %172 = vperm.xlu0 %171, %v150
  %v173 = vpop.permute.xlu0 %172
  %176 = vset.pattern.permute.xlu0 0
  %177 = vperm.xlu0 %176, %v151
  %v178 = vpop.permute.xlu0 %177
  %181 = vset.pattern.permute.xlu0 0
  %182 = vperm.xlu0 %181, %v152
  %v183 = vpop.permute.xlu0 %182
  %186 = vset.pattern.permute.xlu0 0
  %187 = vperm.xlu0 %186, %v153
  %v188 = vpop.permute.xlu0 %187
  %191 = vset.pattern.permute.xlu0 0
  %192 = vperm.xlu0 %191, %v154
  %v193 = vpop.permute.xlu0 %192
  %v195 = vmul.f32 %v158, %v117
  %v196 = vmul.f32 %v163, %v120
  %v197 = vmul.f32 %v168, %v125
  %v198 = vmul.f32 %v173, %v128
  %v199 = vmul.f32 %v178, %v133
  %v200 = vmul.f32 %v183, %v136
  %v201 = vmul.f32 %v188, %v141
  %v202 = vmul.f32 %v193, %v144
  %v203 = vld [vmem:[%s2] sm:$0xff]
  %v204 = vld [vmem:[%s2 + $0x8] sm:$0xff]
  %v205 = vld [vmem:[%s2 + $0x10] sm:$0xff]
  %v206 = vld [vmem:[%s2 + $0x18] sm:$0xff]
  %v207 = vld [vmem:[%s2 + $0x20] sm:$0xff]
  %v208 = vld [vmem:[%s2 + $0x28] sm:$0xff]
  %v209 = vld [vmem:[%s2 + $0x30] sm:$0xff]
  %v210 = vld [vmem:[%s2 + $0x38] sm:$0xff]
  %v211 = vld [vmem:[%s5] sm:$0x1]
  %213 = vset.pattern.permute.xlu0 0
  %214 = vperm.xlu0 %213, %v203
  %v215 = vpop.permute.xlu0 %214
  %218 = vset.pattern.permute.xlu0 0
  %219 = vperm.xlu0 %218, %v204
  %v220 = vpop.permute.xlu0 %219
  %223 = vset.pattern.permute.xlu0 0
  %224 = vperm.xlu0 %223, %v205
  %v225 = vpop.permute.xlu0 %224
  %228 = vset.pattern.permute.xlu0 0
  %229 = vperm.xlu0 %228, %v206
  %v230 = vpop.permute.xlu0 %229
  %233 = vset.pattern.permute.xlu0 0
  %234 = vperm.xlu0 %233, %v207
  %v235 = vpop.permute.xlu0 %234
  %238 = vset.pattern.permute.xlu0 0
  %239 = vperm.xlu0 %238, %v208
  %v240 = vpop.permute.xlu0 %239
  %243 = vset.pattern.permute.xlu0 0
  %244 = vperm.xlu0 %243, %v209
  %v245 = vpop.permute.xlu0 %244
  %248 = vset.pattern.permute.xlu0 0
  %249 = vperm.xlu0 %248, %v210
  %v250 = vpop.permute.xlu0 %249
  %v253 = vlaneseq
  %v254 = vshrl.u32 %v253, 7
  %v255 = vsub.s32 0, %v254
  %v256 = vrot.slane %v211, %v255
  %v258 = vmul.f32 %v215, %v256
  %v259 = vmul.f32 %v220, %v256
  %v260 = vmul.f32 %v225, %v256
  %v261 = vmul.f32 %v230, %v256
  %v262 = vmul.f32 %v235, %v256
  %v263 = vmul.f32 %v240, %v256
  %v264 = vmul.f32 %v245, %v256
  %v265 = vmul.f32 %v250, %v256
  %v266 = vld [vmem:[%s6] sm:$0x1]
  %v268 = vlaneseq
  %v269 = vshrl.u32 %v268, 7
  %v270 = vsub.s32 0, %v269
  %v271 = vrot.slane %v266, %v270
  %v273 = vadd.f32 %v258, %v271
  %v274 = vadd.f32 %v259, %v271
  %v275 = vadd.f32 %v260, %v271
  %v276 = vadd.f32 %v261, %v271
  %v277 = vadd.f32 %v262, %v271
  %v278 = vadd.f32 %v263, %v271
  %v279 = vadd.f32 %v264, %v271
  %v280 = vadd.f32 %v265, %v271
  %v281 = vadd.f32 %v195, %v273
  %v282 = vadd.f32 %v196, %v274
  %v283 = vadd.f32 %v197, %v275
  %v284 = vadd.f32 %v198, %v276
  %v285 = vadd.f32 %v199, %v277
  %v286 = vadd.f32 %v200, %v278
  %v287 = vadd.f32 %v201, %v279
  %v288 = vadd.f32 %v202, %v280
  %v289 = vld [vmem:[%s4] sm:$0xf]
  %v290 = vld [vmem:[%s4 + $0x4] sm:$0xf]
  %v291 = vld [vmem:[%s4 + $0x8] sm:$0xf]
  %v292 = vld [vmem:[%s4 + $0xc] sm:$0xf]
  %v297 = vunpack.c.l.b16 %v289
  %v298 = vunpack.c.l.b16 %v290
  %v299 = vunpack.c.l.b16 %v291
  %v300 = vunpack.c.l.b16 %v292
  %v301 = vpack.c.b16 %v298, %v297
  %v302 = vpack.c.b16 %v300, %v299
  %vm305 = vcmask 261120
  %v307 = vsel %vm305, 0, 0
  %309 = vmatprep.subr.bf16.mxu0 0
  %310 = vmatpush1.bf16.msra.mxu0 %v301
  %311 = vmatprep.subr.bf16.mxu0 0
  %312 = vmatpush1.bf16.msra.mxu0 %v302
  %313 = vmatprep.subr.bf16.mxu0 0
  %314 = vmatpush1.bf16.msra.mxu0 0
  %315 = vmatprep.subr.bf16.mxu0 0
  %316 = vmatpush1.bf16.msra.mxu0 0
  %317 = vmatprep.subr.bf16.mxu0 0
  %318 = vmatpush1.bf16.msra.mxu0 0
  %319 = vmatprep.subr.bf16.mxu0 0
  %320 = vmatpush1.bf16.msra.mxu0 0
  %321 = vmatprep.subr.bf16.mxu0 0
  %322 = vmatpush1.bf16.msra.mxu0 0
  %323 = vmatprep.subr.bf16.mxu0 0
  %324 = vmatpush1.bf16.msra.mxu0 0
  %325 = vmatprep.subr.bf16.mxu0 0
  %326 = vmatpush1.bf16.msra.mxu0 0
  %327 = vmatprep.subr.bf16.mxu0 0
  %328 = vmatpush1.bf16.msra.mxu0 0
  %329 = vmatprep.subr.bf16.mxu0 0
  %330 = vmatpush1.bf16.msra.mxu0 0
  %331 = vmatprep.subr.bf16.mxu0 0
  %332 = vmatpush1.bf16.msra.mxu0 0
  %333 = vmatprep.subr.bf16.mxu0 0
  %334 = vmatpush1.bf16.msra.mxu0 0
  %335 = vmatprep.subr.bf16.mxu0 0
  %336 = vmatpush1.bf16.msra.mxu0 0
  %337 = vmatprep.subr.bf16.mxu0 0
  %338 = vmatpush1.bf16.msra.mxu0 0
  %339 = vmatprep.subr.bf16.mxu0 0
  %340 = vmatpush1.bf16.msra.mxu0 0
  %341 = vmatprep.mubr.bf16.mxu0 0
  %342 = vmatmul.mubr.bf16.gmra.mrb[0].mxu0 %v307
  %v343 = vpop.f32.mrb[0].mxu0
  %v344 = vadd.f32 0.0, %v343
  %v345 = vpop.f32.mrb[0].mxu0
  %v346 = vpop.f32.mrb[0].mxu0
  %v347 = vpop.f32.mrb[0].mxu0
  %348 = vdwg.mxu0
  %v349 = vadd.f32 %v281, %v344
  %v350 = vxor.u32 %v349, 2147483648
  %v351 = vmul.f32 %v350, 1.442695
  %v352 = vpow.pop %v351
  %v353 = vadd.f32 %v352, 1.0
  %v354 = vrcp.pop %v353
  %v355 = vmul.f32 1.0, %v354
  %v356 = vtanh.pop %v349
  %v357 = vmul.f32 %v355, 0.0
  %359 = vrot.lane.b32.xlu0 %v356, 32
  %v360 = vpop.permute.xlu0 %359
  %v362 = vmul.f32 %v355, %v360
  %364 = vrot.lane.b32.xlu0 %v362, 32
  %v365 = vpop.permute.xlu0 %364
  %v367 = vadd.f32 %v357, %v365
  %v368 = vtanh.pop %v367
  %370 = vrot.lane.b32.xlu0 %v368, 32
  %v371 = vpop.permute.xlu0 %370
  %v373 = vmul.f32 %v355, %v371
  %v374 = vpack.c.bf16 %v373, %v373
  %376 = vrot.lane.b32.xlu0 %v374, 64
  %v377 = vpop.permute.xlu0 %376
  %v379 = vsel %vm305, %v377, 0
  %381 = vmatprep.subr.bf16.mxu0 0
  %382 = vmatpush1.bf16.msra.mxu0 %v301
  %383 = vmatprep.subr.bf16.mxu0 0
  %384 = vmatpush1.bf16.msra.mxu0 %v302
  %385 = vmatprep.subr.bf16.mxu0 0
  %386 = vmatpush1.bf16.msra.mxu0 0
  %387 = vmatprep.subr.bf16.mxu0 0
  %388 = vmatpush1.bf16.msra.mxu0 0
  %389 = vmatprep.subr.bf16.mxu0 0
  %390 = vmatpush1.bf16.msra.mxu0 0
  %391 = vmatprep.subr.bf16.mxu0 0
  %392 = vmatpush1.bf16.msra.mxu0 0
  %393 = vmatprep.subr.bf16.mxu0 0
  %394 = vmatpush1.bf16.msra.mxu0 0
  %395 = vmatprep.subr.bf16.mxu0 0
  %396 = vmatpush1.bf16.msra.mxu0 0
  %397 = vmatprep.subr.bf16.mxu0 0
  %398 = vmatpush1.bf16.msra.mxu0 0
  %399 = vmatprep.subr.bf16.mxu0 0
  %400 = vmatpush1.bf16.msra.mxu0 0
  %401 = vmatprep.subr.bf16.mxu0 0
  %402 = vmatpush1.bf16.msra.mxu0 0
  %403 = vmatprep.subr.bf16.mxu0 0
  %404 = vmatpush1.bf16.msra.mxu0 0
  %405 = vmatprep.subr.bf16.mxu0 0
  %406 = vmatpush1.bf16.msra.mxu0 0
  %407 = vmatprep.subr.bf16.mxu0 0
  %408 = vmatpush1.bf16.msra.mxu0 0
  %409 = vmatprep.subr.bf16.mxu0 0
  %410 = vmatpush1.bf16.msra.mxu0 0
  %411 = vmatprep.subr.bf16.mxu0 0
  %412 = vmatpush1.bf16.msra.mxu0 0
  %413 = vmatprep.mubr.bf16.mxu0 0
  %414 = vmatmul.mubr.bf16.gmra.mrb[0].mxu0 %v379
  %v415 = vpop.f32.mrb[0].mxu0
  %v416 = vadd.f32 0.0, %v415
  %v417 = vpop.f32.mrb[0].mxu0
  %v418 = vpop.f32.mrb[0].mxu0
  %v419 = vpop.f32.mrb[0].mxu0
  %420 = vdwg.mxu0
  %v421 = vadd.f32 %v282, %v416
  %v422 = vxor.u32 %v421, 2147483648
  %v423 = vmul.f32 %v422, 1.442695
  %v424 = vpow.pop %v423
  %v425 = vadd.f32 %v424, 1.0
  %v426 = vrcp.pop %v425
  %v427 = vmul.f32 1.0, %v426
  %v428 = vtanh.pop %v421
  %v429 = vmul.f32 %v427, %v367
  %431 = vrot.lane.b32.xlu0 %v428, 32
  %v432 = vpop.permute.xlu0 %431
  %v434 = vmul.f32 %v427, %v432
  %436 = vrot.lane.b32.xlu0 %v434, 32
  %v437 = vpop.permute.xlu0 %436
  %v439 = vadd.f32 %v429, %v437
  %v440 = vtanh.pop %v439
  %442 = vrot.lane.b32.xlu0 %v440, 32
  %v443 = vpop.permute.xlu0 %442
  %v445 = vmul.f32 %v427, %v443
  %v446 = vpack.c.bf16 %v445, %v445
  %448 = vrot.lane.b32.xlu0 %v446, 64
  %v449 = vpop.permute.xlu0 %448
  %v451 = vsel %vm305, %v449, 0
  %453 = vmatprep.subr.bf16.mxu0 0
  %454 = vmatpush1.bf16.msra.mxu0 %v301
  %455 = vmatprep.subr.bf16.mxu0 0
  %456 = vmatpush1.bf16.msra.mxu0 %v302
  %457 = vmatprep.subr.bf16.mxu0 0
  %458 = vmatpush1.bf16.msra.mxu0 0
  %459 = vmatprep.subr.bf16.mxu0 0
  %460 = vmatpush1.bf16.msra.mxu0 0
  %461 = vmatprep.subr.bf16.mxu0 0
  %462 = vmatpush1.bf16.msra.mxu0 0
  %463 = vmatprep.subr.bf16.mxu0 0
  %464 = vmatpush1.bf16.msra.mxu0 0
  %465 = vmatprep.subr.bf16.mxu0 0
  %466 = vmatpush1.bf16.msra.mxu0 0
  %467 = vmatprep.subr.bf16.mxu0 0
  %468 = vmatpush1.bf16.msra.mxu0 0
  %469 = vmatprep.subr.bf16.mxu0 0
  %470 = vmatpush1.bf16.msra.mxu0 0
  %471 = vmatprep.subr.bf16.mxu0 0
  %472 = vmatpush1.bf16.msra.mxu0 0
  %473 = vmatprep.subr.bf16.mxu0 0
  %474 = vmatpush1.bf16.msra.mxu0 0
  %475 = vmatprep.subr.bf16.mxu0 0
  %476 = vmatpush1.bf16.msra.mxu0 0
  %477 = vmatprep.subr.bf16.mxu0 0
  %478 = vmatpush1.bf16.msra.mxu0 0
  %479 = vmatprep.subr.bf16.mxu0 0
  %480 = vmatpush1.bf16.msra.mxu0 0
  %481 = vmatprep.subr.bf16.mxu0 0
  %482 = vmatpush1.bf16.msra.mxu0 0
  %483 = vmatprep.subr.bf16.mxu0 0
  %484 = vmatpush1.bf16.msra.mxu0 0
  %485 = vmatprep.mubr.bf16.mxu0 0
  %486 = vmatmul.mubr.bf16.gmra.mrb[0].mxu0 %v451
  %v487 = vpop.f32.mrb[0].mxu0
  %v488 = vadd.f32 0.0, %v487
  %v489 = vpop.f32.mrb[0].mxu0
  %v490 = vpop.f32.mrb[0].mxu0
  %v491 = vpop.f32.mrb[0].mxu0
  %492 = vdwg.mxu0
  %v493 = vadd.f32 %v283, %v488
  %v494 = vxor.u32 %v493, 2147483648
  %v495 = vmul.f32 %v494, 1.442695
  %v496 = vpow.pop %v495
  %v497 = vadd.f32 %v496, 1.0
  %v498 = vrcp.pop %v497
  %v499 = vmul.f32 1.0, %v498
  %v500 = vtanh.pop %v493
  %v501 = vmul.f32 %v499, %v439
  %503 = vrot.lane.b32.xlu0 %v500, 32
  %v504 = vpop.permute.xlu0 %503
  %v506 = vmul.f32 %v499, %v504
  %508 = vrot.lane.b32.xlu0 %v506, 32
  %v509 = vpop.permute.xlu0 %508
  %v511 = vadd.f32 %v501, %v509
  %v512 = vtanh.pop %v511
  %514 = vrot.lane.b32.xlu0 %v512, 32
  %v515 = vpop.permute.xlu0 %514
  %v517 = vmul.f32 %v499, %v515
  %v518 = vpack.c.bf16 %v517, %v517
  %520 = vrot.lane.b32.xlu0 %v518, 64
  %v521 = vpop.permute.xlu0 %520
  %v523 = vsel %vm305, %v521, 0
  %525 = vmatprep.subr.bf16.mxu0 0
  %526 = vmatpush1.bf16.msra.mxu0 %v301
  %527 = vmatprep.subr.bf16.mxu0 0
  %528 = vmatpush1.bf16.msra.mxu0 %v302
  %529 = vmatprep.subr.bf16.mxu0 0
  %530 = vmatpush1.bf16.msra.mxu0 0
  %531 = vmatprep.subr.bf16.mxu0 0
  %532 = vmatpush1.bf16.msra.mxu0 0
  %533 = vmatprep.subr.bf16.mxu0 0
  %534 = vmatpush1.bf16.msra.mxu0 0
  %535 = vmatprep.subr.bf16.mxu0 0
  %536 = vmatpush1.bf16.msra.mxu0 0
  %537 = vmatprep.subr.bf16.mxu0 0
  %538 = vmatpush1.bf16.msra.mxu0 0
  %539 = vmatprep.subr.bf16.mxu0 0
  %540 = vmatpush1.bf16.msra.mxu0 0
  %541 = vmatprep.subr.bf16.mxu0 0
  %542 = vmatpush1.bf16.msra.mxu0 0
  %543 = vmatprep.subr.bf16.mxu0 0
  %544 = vmatpush1.bf16.msra.mxu0 0
  %545 = vmatprep.subr.bf16.mxu0 0
  %546 = vmatpush1.bf16.msra.mxu0 0
  %547 = vmatprep.subr.bf16.mxu0 0
  %548 = vmatpush1.bf16.msra.mxu0 0
  %549 = vmatprep.subr.bf16.mxu0 0
  %550 = vmatpush1.bf16.msra.mxu0 0
  %551 = vmatprep.subr.bf16.mxu0 0
  %552 = vmatpush1.bf16.msra.mxu0 0
  %553 = vmatprep.subr.bf16.mxu0 0
  %554 = vmatpush1.bf16.msra.mxu0 0
  %555 = vmatprep.subr.bf16.mxu0 0
  %556 = vmatpush1.bf16.msra.mxu0 0
  %557 = vmatprep.mubr.bf16.mxu0 0
  %558 = vmatmul.mubr.bf16.gmra.mrb[0].mxu0 %v523
  %v559 = vpop.f32.mrb[0].mxu0
  %v560 = vadd.f32 0.0, %v559
  %v561 = vpop.f32.mrb[0].mxu0
  %v562 = vpop.f32.mrb[0].mxu0
  %v563 = vpop.f32.mrb[0].mxu0
  %564 = vdwg.mxu0
  %v565 = vadd.f32 %v284, %v560
  %v566 = vxor.u32 %v565, 2147483648
  %v567 = vmul.f32 %v566, 1.442695
  %v568 = vpow.pop %v567
  %v569 = vadd.f32 %v568, 1.0
  %v570 = vrcp.pop %v569
  %v571 = vmul.f32 1.0, %v570
  %v572 = vtanh.pop %v565
  %v573 = vmul.f32 %v571, %v511
  %575 = vrot.lane.b32.xlu0 %v572, 32
  %v576 = vpop.permute.xlu0 %575
  %v578 = vmul.f32 %v571, %v576
  %580 = vrot.lane.b32.xlu0 %v578, 32
  %v581 = vpop.permute.xlu0 %580
  %v583 = vadd.f32 %v573, %v581
  %v584 = vtanh.pop %v583
  %586 = vrot.lane.b32.xlu0 %v584, 32
  %v587 = vpop.permute.xlu0 %586
  %v589 = vmul.f32 %v571, %v587
  %v590 = vpack.c.bf16 %v589, %v589
  %592 = vrot.lane.b32.xlu0 %v590, 64
  %v593 = vpop.permute.xlu0 %592
  %v595 = vsel %vm305, %v593, 0
  %597 = vmatprep.subr.bf16.mxu0 0
  %598 = vmatpush1.bf16.msra.mxu0 %v301
  %599 = vmatprep.subr.bf16.mxu0 0
  %600 = vmatpush1.bf16.msra.mxu0 %v302
  %601 = vmatprep.subr.bf16.mxu0 0
  %602 = vmatpush1.bf16.msra.mxu0 0
  %603 = vmatprep.subr.bf16.mxu0 0
  %604 = vmatpush1.bf16.msra.mxu0 0
  %605 = vmatprep.subr.bf16.mxu0 0
  %606 = vmatpush1.bf16.msra.mxu0 0
  %607 = vmatprep.subr.bf16.mxu0 0
  %608 = vmatpush1.bf16.msra.mxu0 0
  %609 = vmatprep.subr.bf16.mxu0 0
  %610 = vmatpush1.bf16.msra.mxu0 0
  %611 = vmatprep.subr.bf16.mxu0 0
  %612 = vmatpush1.bf16.msra.mxu0 0
  %613 = vmatprep.subr.bf16.mxu0 0
  %614 = vmatpush1.bf16.msra.mxu0 0
  %615 = vmatprep.subr.bf16.mxu0 0
  %616 = vmatpush1.bf16.msra.mxu0 0
  %617 = vmatprep.subr.bf16.mxu0 0
  %618 = vmatpush1.bf16.msra.mxu0 0
  %619 = vmatprep.subr.bf16.mxu0 0
  %620 = vmatpush1.bf16.msra.mxu0 0
  %621 = vmatprep.subr.bf16.mxu0 0
  %622 = vmatpush1.bf16.msra.mxu0 0
  %623 = vmatprep.subr.bf16.mxu0 0
  %624 = vmatpush1.bf16.msra.mxu0 0
  %625 = vmatprep.subr.bf16.mxu0 0
  %626 = vmatpush1.bf16.msra.mxu0 0
  %627 = vmatprep.subr.bf16.mxu0 0
  %628 = vmatpush1.bf16.msra.mxu0 0
  %629 = vmatprep.mubr.bf16.mxu0 0
  %630 = vmatmul.mubr.bf16.gmra.mrb[0].mxu0 %v595
  %v631 = vpop.f32.mrb[0].mxu0
  %v632 = vadd.f32 0.0, %v631
  %v633 = vpop.f32.mrb[0].mxu0
  %v634 = vpop.f32.mrb[0].mxu0
  %v635 = vpop.f32.mrb[0].mxu0
  %636 = vdwg.mxu0
  %v637 = vadd.f32 %v285, %v632
  %v638 = vxor.u32 %v637, 2147483648
  %v639 = vmul.f32 %v638, 1.442695
  %v640 = vpow.pop %v639
  %v641 = vadd.f32 %v640, 1.0
  %v642 = vrcp.pop %v641
  %v643 = vmul.f32 1.0, %v642
  %v644 = vtanh.pop %v637
  %v645 = vmul.f32 %v643, %v583
  %647 = vrot.lane.b32.xlu0 %v644, 32
  %v648 = vpop.permute.xlu0 %647
  %v650 = vmul.f32 %v643, %v648
  %652 = vrot.lane.b32.xlu0 %v650, 32
  %v653 = vpop.permute.xlu0 %652
  %v655 = vadd.f32 %v645, %v653
  %v656 = vtanh.pop %v655
  %658 = vrot.lane.b32.xlu0 %v656, 32
  %v659 = vpop.permute.xlu0 %658
  %v661 = vmul.f32 %v643, %v659
  %v662 = vpack.c.bf16 %v661, %v661
  %664 = vrot.lane.b32.xlu0 %v662, 64
  %v665 = vpop.permute.xlu0 %664
  %v667 = vsel %vm305, %v665, 0
  %669 = vmatprep.subr.bf16.mxu0 0
  %670 = vmatpush1.bf16.msra.mxu0 %v301
  %671 = vmatprep.subr.bf16.mxu0 0
  %672 = vmatpush1.bf16.msra.mxu0 %v302
  %673 = vmatprep.subr.bf16.mxu0 0
  %674 = vmatpush1.bf16.msra.mxu0 0
  %675 = vmatprep.subr.bf16.mxu0 0
  %676 = vmatpush1.bf16.msra.mxu0 0
  %677 = vmatprep.subr.bf16.mxu0 0
  %678 = vmatpush1.bf16.msra.mxu0 0
  %679 = vmatprep.subr.bf16.mxu0 0
  %680 = vmatpush1.bf16.msra.mxu0 0
  %681 = vmatprep.subr.bf16.mxu0 0
  %682 = vmatpush1.bf16.msra.mxu0 0
  %683 = vmatprep.subr.bf16.mxu0 0
  %684 = vmatpush1.bf16.msra.mxu0 0
  %685 = vmatprep.subr.bf16.mxu0 0
  %686 = vmatpush1.bf16.msra.mxu0 0
  %687 = vmatprep.subr.bf16.mxu0 0
  %688 = vmatpush1.bf16.msra.mxu0 0
  %689 = vmatprep.subr.bf16.mxu0 0
  %690 = vmatpush1.bf16.msra.mxu0 0
  %691 = vmatprep.subr.bf16.mxu0 0
  %692 = vmatpush1.bf16.msra.mxu0 0
  %693 = vmatprep.subr.bf16.mxu0 0
  %694 = vmatpush1.bf16.msra.mxu0 0
  %695 = vmatprep.subr.bf16.mxu0 0
  %696 = vmatpush1.bf16.msra.mxu0 0
  %697 = vmatprep.subr.bf16.mxu0 0
  %698 = vmatpush1.bf16.msra.mxu0 0
  %699 = vmatprep.subr.bf16.mxu0 0
  %700 = vmatpush1.bf16.msra.mxu0 0
  %701 = vmatprep.mubr.bf16.mxu0 0
  %702 = vmatmul.mubr.bf16.gmra.mrb[0].mxu0 %v667
  %v703 = vpop.f32.mrb[0].mxu0
  %v704 = vadd.f32 0.0, %v703
  %v705 = vpop.f32.mrb[0].mxu0
  %v706 = vpop.f32.mrb[0].mxu0
  %v707 = vpop.f32.mrb[0].mxu0
  %708 = vdwg.mxu0
  %v709 = vadd.f32 %v286, %v704
  %v710 = vxor.u32 %v709, 2147483648
  %v711 = vmul.f32 %v710, 1.442695
  %v712 = vpow.pop %v711
  %v713 = vadd.f32 %v712, 1.0
  %v714 = vrcp.pop %v713
  %v715 = vmul.f32 1.0, %v714
  %v716 = vtanh.pop %v709
  %v717 = vmul.f32 %v715, %v655
  %719 = vrot.lane.b32.xlu0 %v716, 32
  %v720 = vpop.permute.xlu0 %719
  %v722 = vmul.f32 %v715, %v720
  %724 = vrot.lane.b32.xlu0 %v722, 32
  %v725 = vpop.permute.xlu0 %724
  %v727 = vadd.f32 %v717, %v725
  %v728 = vtanh.pop %v727
  %730 = vrot.lane.b32.xlu0 %v728, 32
  %v731 = vpop.permute.xlu0 %730
  %v733 = vmul.f32 %v715, %v731
  %v734 = vpack.c.bf16 %v733, %v733
  %736 = vrot.lane.b32.xlu0 %v734, 64
  %v737 = vpop.permute.xlu0 %736
  %v739 = vsel %vm305, %v737, 0
  %741 = vmatprep.subr.bf16.mxu0 0
  %742 = vmatpush1.bf16.msra.mxu0 %v301
  %743 = vmatprep.subr.bf16.mxu0 0
  %744 = vmatpush1.bf16.msra.mxu0 %v302
  %745 = vmatprep.subr.bf16.mxu0 0
  %746 = vmatpush1.bf16.msra.mxu0 0
  %747 = vmatprep.subr.bf16.mxu0 0
  %748 = vmatpush1.bf16.msra.mxu0 0
  %749 = vmatprep.subr.bf16.mxu0 0
  %750 = vmatpush1.bf16.msra.mxu0 0
  %751 = vmatprep.subr.bf16.mxu0 0
  %752 = vmatpush1.bf16.msra.mxu0 0
  %753 = vmatprep.subr.bf16.mxu0 0
  %754 = vmatpush1.bf16.msra.mxu0 0
  %755 = vmatprep.subr.bf16.mxu0 0
  %756 = vmatpush1.bf16.msra.mxu0 0
  %757 = vmatprep.subr.bf16.mxu0 0
  %758 = vmatpush1.bf16.msra.mxu0 0
  %759 = vmatprep.subr.bf16.mxu0 0
  %760 = vmatpush1.bf16.msra.mxu0 0
  %761 = vmatprep.subr.bf16.mxu0 0
  %762 = vmatpush1.bf16.msra.mxu0 0
  %763 = vmatprep.subr.bf16.mxu0 0
  %764 = vmatpush1.bf16.msra.mxu0 0
  %765 = vmatprep.subr.bf16.mxu0 0
  %766 = vmatpush1.bf16.msra.mxu0 0
  %767 = vmatprep.subr.bf16.mxu0 0
  %768 = vmatpush1.bf16.msra.mxu0 0
  %769 = vmatprep.subr.bf16.mxu0 0
  %770 = vmatpush1.bf16.msra.mxu0 0
  %771 = vmatprep.subr.bf16.mxu0 0
  %772 = vmatpush1.bf16.msra.mxu0 0
  %773 = vmatprep.mubr.bf16.mxu0 0
  %774 = vmatmul.mubr.bf16.gmra.mrb[0].mxu0 %v739
  %v775 = vpop.f32.mrb[0].mxu0
  %v776 = vadd.f32 0.0, %v775
  %v777 = vpop.f32.mrb[0].mxu0
  %v778 = vpop.f32.mrb[0].mxu0
  %v779 = vpop.f32.mrb[0].mxu0
  %780 = vdwg.mxu0
  %v781 = vadd.f32 %v287, %v776
  %v782 = vxor.u32 %v781, 2147483648
  %v783 = vmul.f32 %v782, 1.442695
  %v784 = vpow.pop %v783
  %v785 = vadd.f32 %v784, 1.0
  %v786 = vrcp.pop %v785
  %v787 = vmul.f32 1.0, %v786
  %v788 = vtanh.pop %v781
  %v789 = vmul.f32 %v787, %v727
  %791 = vrot.lane.b32.xlu0 %v788, 32
  %v792 = vpop.permute.xlu0 %791
  %v794 = vmul.f32 %v787, %v792
  %796 = vrot.lane.b32.xlu0 %v794, 32
  %v797 = vpop.permute.xlu0 %796
  %v799 = vadd.f32 %v789, %v797
  %v800 = vtanh.pop %v799
  %802 = vrot.lane.b32.xlu0 %v800, 32
  %v803 = vpop.permute.xlu0 %802
  %v805 = vmul.f32 %v787, %v803
  %v806 = vpack.c.bf16 %v805, %v805
  %808 = vrot.lane.b32.xlu0 %v806, 64
  %v809 = vpop.permute.xlu0 %808
  %v811 = vsel %vm305, %v809, 0
  %813 = vmatprep.subr.bf16.mxu0 0
  %814 = vmatpush1.bf16.msra.mxu0 %v301
  %815 = vmatprep.subr.bf16.mxu0 0
  %816 = vmatpush1.bf16.msra.mxu0 %v302
  %817 = vmatprep.subr.bf16.mxu0 0
  %818 = vmatpush1.bf16.msra.mxu0 0
  %819 = vmatprep.subr.bf16.mxu0 0
  %820 = vmatpush1.bf16.msra.mxu0 0
  %821 = vmatprep.subr.bf16.mxu0 0
  %822 = vmatpush1.bf16.msra.mxu0 0
  %823 = vmatprep.subr.bf16.mxu0 0
  %824 = vmatpush1.bf16.msra.mxu0 0
  %825 = vmatprep.subr.bf16.mxu0 0
  %826 = vmatpush1.bf16.msra.mxu0 0
  %827 = vmatprep.subr.bf16.mxu0 0
  %828 = vmatpush1.bf16.msra.mxu0 0
  %829 = vmatprep.subr.bf16.mxu0 0
  %830 = vmatpush1.bf16.msra.mxu0 0
  %831 = vmatprep.subr.bf16.mxu0 0
  %832 = vmatpush1.bf16.msra.mxu0 0
  %833 = vmatprep.subr.bf16.mxu0 0
  %834 = vmatpush1.bf16.msra.mxu0 0
  %835 = vmatprep.subr.bf16.mxu0 0
  %836 = vmatpush1.bf16.msra.mxu0 0
  %837 = vmatprep.subr.bf16.mxu0 0
  %838 = vmatpush1.bf16.msra.mxu0 0
  %839 = vmatprep.subr.bf16.mxu0 0
  %840 = vmatpush1.bf16.msra.mxu0 0
  %841 = vmatprep.subr.bf16.mxu0 0
  %842 = vmatpush1.bf16.msra.mxu0 0
  %843 = vmatprep.subr.bf16.mxu0 0
  %844 = vmatpush1.bf16.msra.mxu0 0
  %845 = vmatprep.mubr.bf16.mxu0 0
  %846 = vmatmul.mubr.bf16.gmra.mrb[0].mxu0 %v811
  %v847 = vpop.f32.mrb[0].mxu0
  %v848 = vadd.f32 0.0, %v847
  %v849 = vpop.f32.mrb[0].mxu0
  %v850 = vpop.f32.mrb[0].mxu0
  %v851 = vpop.f32.mrb[0].mxu0
  %852 = vdwg.mxu0
  %v853 = vadd.f32 %v288, %v848
  %v854 = vxor.u32 %v853, 2147483648
  %v855 = vmul.f32 %v854, 1.442695
  %v856 = vpow.pop %v855
  %v857 = vadd.f32 %v856, 1.0
  %v858 = vrcp.pop %v857
  %v859 = vmul.f32 1.0, %v858
  %v860 = vtanh.pop %v853
  %v861 = vmul.f32 %v859, %v799
  %863 = vrot.lane.b32.xlu0 %v860, 32
  %v864 = vpop.permute.xlu0 %863
  %v866 = vmul.f32 %v859, %v864
  %868 = vrot.lane.b32.xlu0 %v866, 32
  %v869 = vpop.permute.xlu0 %868
  %v871 = vadd.f32 %v861, %v869
  %v872 = vtanh.pop %v871
  %874 = vrot.lane.b32.xlu0 %v872, 32
  %v875 = vpop.permute.xlu0 %874
  %v877 = vmul.f32 %v859, %v875
  %v878 = vpack.c.bf16 %v877, %v877
  %v879 = vld [vmem:[%s7] sm:$0xf]
  %v880 = vld [vmem:[%s7 + $0x4] sm:$0xf]
  %v881 = vld [vmem:[%s7 + $0x8] sm:$0xf]
  %v882 = vld [vmem:[%s7 + $0xc] sm:$0xf]
  %v883 = vld [vmem:[%s8] sm:$0x1]
  %v885 = vlaneseq
  %v886 = vshrl.u32 %v885, 7
  %v887 = vsub.s32 0, %v886
  %v888 = vrot.slane %v883, %v887
  %891 = vrot.lane.b32.xlu0 %v878, 64
  %v892 = vpop.permute.xlu0 %891
  %v897 = vunpack.c.l.b16 %v879
  %v898 = vunpack.c.l.b16 %v880
  %v899 = vunpack.c.l.b16 %v881
  %v900 = vunpack.c.l.b16 %v882
  %v901 = vpack.c.b16 %v898, %v897
  %v902 = vpack.c.b16 %v900, %v899
  %v906 = vsel %vm305, %v892, 0
  %908 = vmatprep.subr.bf16.mxu0 0
  %909 = vmatpush1.bf16.msra.mxu0 %v901
  %910 = vmatprep.subr.bf16.mxu0 0
  %911 = vmatpush1.bf16.msra.mxu0 %v902
  %912 = vmatprep.subr.bf16.mxu0 0
  %913 = vmatpush1.bf16.msra.mxu0 0
  %914 = vmatprep.subr.bf16.mxu0 0
  %915 = vmatpush1.bf16.msra.mxu0 0
  %916 = vmatprep.subr.bf16.mxu0 0
  %917 = vmatpush1.bf16.msra.mxu0 0
  %918 = vmatprep.subr.bf16.mxu0 0
  %919 = vmatpush1.bf16.msra.mxu0 0
  %920 = vmatprep.subr.bf16.mxu0 0
  %921 = vmatpush1.bf16.msra.mxu0 0
  %922 = vmatprep.subr.bf16.mxu0 0
  %923 = vmatpush1.bf16.msra.mxu0 0
  %924 = vmatprep.subr.bf16.mxu0 0
  %925 = vmatpush1.bf16.msra.mxu0 0
  %926 = vmatprep.subr.bf16.mxu0 0
  %927 = vmatpush1.bf16.msra.mxu0 0
  %928 = vmatprep.subr.bf16.mxu0 0
  %929 = vmatpush1.bf16.msra.mxu0 0
  %930 = vmatprep.subr.bf16.mxu0 0
  %931 = vmatpush1.bf16.msra.mxu0 0
  %932 = vmatprep.subr.bf16.mxu0 0
  %933 = vmatpush1.bf16.msra.mxu0 0
  %934 = vmatprep.subr.bf16.mxu0 0
  %935 = vmatpush1.bf16.msra.mxu0 0
  %936 = vmatprep.subr.bf16.mxu0 0
  %937 = vmatpush1.bf16.msra.mxu0 0
  %938 = vmatprep.subr.bf16.mxu0 0
  %939 = vmatpush1.bf16.msra.mxu0 0
  %940 = vmatprep.mubr.bf16.mxu0 0
  %941 = vmatmul.mubr.bf16.gmra.mrb[0].mxu0 %v906
  %v942 = vpop.f32.mrb[0].mxu0
  %v943 = vadd.f32 %v888, %v942
  %v944 = vpop.f32.mrb[0].mxu0
  %v945 = vpop.f32.mrb[0].mxu0
  %v946 = vpop.f32.mrb[0].mxu0
  %947 = vdwg.mxu0
  %948 = vst [vmem:[%s9] sm:$0xff] %v943
  // Predicated region
  $region38: #{lstm_forward.1} parent=0 // pred_check
    _
  $region39: #{lstm_forward.1} parent=0 // pred_check_branch
    %950 = sbr.rel (0) target = $region41
  $region40: #{lstm_forward.1} parent=0 // pred_region
    _
  $region41: #{lstm_forward.1} parent=0 // pred_fallthru
    _
  // Predicated region
  $region42: #{lstm_forward.1} parent=0 // pred_check
    _
  $region43: #{lstm_forward.1} parent=0 // pred_check_branch
    %952 = sbr.rel (0) target = $region45
  $region44: #{lstm_forward.1} parent=0 // pred_region
    _
  $region45: #{lstm_forward.1} parent=0 // pred_fallthru
    _

</llo_original>
